<compile_context>
chip_gen: v6e
topology: v6e:2x2x1
jax: 0.10.0
libtpu: 0.0.40
codegen_flags: <defaults>
</compile_context>

<pallas_src>
import functools

import jax
import jax.numpy as jnp
from jax.experimental import pallas as pl
from jax.experimental.pallas import tpu as pltpu

LANE = 128
SUBLANE = 8


def _round_up(x, m):
    return ((x + m - 1) // m) * m


def _default_vmem_limit_bytes():
    """~half of physical VMEM (32 MiB on v7x, 64 MiB on v5e/v6e), capped."""
    try:
        phys = int(pltpu.get_tpu_info().vmem_capacity_bytes)
        return max(32 * 1024 * 1024, min(96 * 1024 * 1024, phys // 2))
    except Exception:
        return 32 * 1024 * 1024


def _encoder_cvae_kernel(
    u_ref,            # (TB, in_dim)           -- real bytes only
    w1_ref, b1_ref,   # (in_pad, h0_pad), (1, h0_pad)
    w2_ref, b2_ref,   # (h0_pad, h1_pad), (1, h1_pad)
    wh_ref, bh_ref,   # fused heads: (h1_pad, 2*l_pad), (1, 2*l_pad)
    eps_ref,          # (TB, latent)           -- real bytes only
    z_ref, mu_ref, sigma_ref,   # (TB, latent) each
    *, in_dim, in_pad, l_pad, latent,
):
    u = u_ref[...]
    # Pad the contraction dim to a full lane multiple inside VMEM only
    # (zeros x zero weight rows => exact), keeping the MXU dot aligned.
    if in_pad != in_dim:
        u = jnp.concatenate(
            [u, jnp.zeros((u.shape[0], in_pad - in_dim), dtype=u.dtype)], axis=1)

    # l1 + relu
    z1 = jnp.maximum(
        jnp.dot(u, w1_ref[...], preferred_element_type=jnp.float32) + b1_ref[...],
        0.0)

    # l2 + relu
    z2 = jnp.maximum(
        jnp.dot(z1, w2_ref[...], preferred_element_type=jnp.float32) + b2_ref[...],
        0.0)

    # fused mu|sigma head: one MXU pass; 128-aligned split afterwards.
    heads = jnp.dot(z2, wh_ref[...], preferred_element_type=jnp.float32) + bh_ref[...]
    mu = heads[:, :latent]
    sigma = heads[:, l_pad:l_pad + latent]

    # reparameterization: z = mu + exp(sigma / 2) * epsilon  (f32 VPU/EUP)
    z = mu + jnp.exp(sigma * 0.5) * eps_ref[...]

    # direct thin stores -- no concatenate, no fat padded output slab
    z_ref[...] = z.astype(z_ref.dtype)
    mu_ref[...] = mu.astype(mu_ref.dtype)
    sigma_ref[...] = sigma.astype(sigma_ref.dtype)


def prepare_encoder_params(params):
    """Pad + fuse weights ONCE, outside the per-call hot path.

    params: dict with w1,b1,w2,b2,w_mu,b_mu,w_sigma,b_sigma
            (weights stored as (in_features, out_features), biases as (1, out)).
    """
    f32 = jnp.float32
    in_dim, h0 = params["w1"].shape
    h1 = params["w2"].shape[1]
    latent = params["w_mu"].shape[1]

    in_pad = _round_up(in_dim, LANE)
    h0_pad = _round_up(h0, LANE)
    h1_pad = _round_up(h1, LANE)
    l_pad = _round_up(latent, LANE)

    w1 = jnp.zeros((in_pad, h0_pad), f32).at[:in_dim, :h0].set(params["w1"].astype(f32))
    b1 = jnp.zeros((1, h0_pad), f32).at[:, :h0].set(params["b1"].astype(f32))
    w2 = jnp.zeros((h0_pad, h1_pad), f32).at[:h0, :h1].set(params["w2"].astype(f32))
    b2 = jnp.zeros((1, h1_pad), f32).at[:, :h1].set(params["b2"].astype(f32))
    # fused heads: columns [0, l_pad) hold mu, [l_pad, 2*l_pad) sigma.
    wh = (jnp.zeros((h1_pad, 2 * l_pad), f32)
          .at[:h1, :latent].set(params["w_mu"].astype(f32))
          .at[:h1, l_pad:l_pad + latent].set(params["w_sigma"].astype(f32)))
    bh = (jnp.zeros((1, 2 * l_pad), f32)
          .at[:, :latent].set(params["b_mu"].astype(f32))
          .at[:, l_pad:l_pad + latent].set(params["b_sigma"].astype(f32)))

    return dict(w1=w1, b1=b1, w2=w2, b2=b2, wh=wh, bh=bh,
                in_dim=in_dim, latent=latent,
                in_pad=in_pad, h0_pad=h0_pad, h1_pad=h1_pad, l_pad=l_pad)


def encoder_cvae_forward(u, prepared, eps, *, batch_tile=2048):
    """EncoderCVAE forward in one Pallas call.

    u:        (B, N + num_params) float array
    prepared: output of prepare_encoder_params (padded/fused weights, static dims)
    eps:      (B, latent) standard-normal noise (randn_like in the reference)
    returns   (z, mu, sigma), each (B, latent) float32
    """
    f32 = jnp.float32
    B, in_dim = u.shape
    assert in_dim == prepared["in_dim"], "input width mismatch with prepared params"
    latent = prepared["latent"]
    in_pad, h0_pad = prepared["in_pad"], prepared["h0_pad"]
    h1_pad, l_pad = prepared["h1_pad"], prepared["l_pad"]

    # ---- batch tiling (only the batch dim is ever padded in HBM) -----------
    b8 = _round_up(max(B, 1), SUBLANE)
    tb = min(_round_up(batch_tile, SUBLANE), b8)
    # Give the 'parallel' batch axis >=2 tiles when the batch is large enough
    # so v7x can shard grid tiles across its two TensorCores.
    if tb == b8 and b8 >= 1024:
        tb = _round_up((b8 + 1) // 2, SUBLANE)
    b_pad = _round_up(b8, tb)
    grid = (b_pad // tb,)

    u_p = u.astype(f32)
    eps_p = eps.astype(f32)
    if b_pad != B:
        u_p = jnp.zeros((b_pad, in_dim), f32).at[:B].set(u_p)
        eps_p = jnp.zeros((b_pad, latent), f32).at[:B].set(eps_p)

    # ---- specs --------------------------------------------------------------
    # Weights/biases are VMEM-resident (constant block index -> fetched once);
    # they are tiny, so the default double-buffering overhead is negligible.
    const0 = lambda i: (0, 0)
    stream = lambda i: (i, 0)
    in_specs = [
        pl.BlockSpec((tb, in_dim), stream),            # u      (real width)
        pl.BlockSpec((in_pad, h0_pad), const0),        # w1
        pl.BlockSpec((1, h0_pad), const0),             # b1
        pl.BlockSpec((h0_pad, h1_pad), const0),        # w2
        pl.BlockSpec((1, h1_pad), const0),             # b2
        pl.BlockSpec((h1_pad, 2 * l_pad), const0),     # w_heads
        pl.BlockSpec((1, 2 * l_pad), const0),          # b_heads
        pl.BlockSpec((tb, latent), stream),            # eps    (real width)
    ]
    out_specs = (
        pl.BlockSpec((tb, latent), stream),            # z
        pl.BlockSpec((tb, latent), stream),            # mu
        pl.BlockSpec((tb, latent), stream),            # sigma
    )
    out_shape = (
        jax.ShapeDtypeStruct((b_pad, latent), f32),
        jax.ShapeDtypeStruct((b_pad, latent), f32),
        jax.ShapeDtypeStruct((b_pad, latent), f32),
    )

    # advisory cost estimate for XLA's scheduler (real HBM bytes only)
    flops = 2 * b_pad * (in_pad * h0_pad + h0_pad * h1_pad + h1_pad * 2 * l_pad)
    bytes_accessed = 4 * (
        b_pad * (in_dim + latent + 3 * latent)
        + in_pad * h0_pad + h0_pad
        + h0_pad * h1_pad + h1_pad
        + h1_pad * 2 * l_pad + 2 * l_pad)
    cost = pl.CostEstimate(
        flops=int(flops),
        transcendentals=int(b_pad * latent),
        bytes_accessed=int(bytes_accessed),
    )

    z, mu, sigma = pl.pallas_call(
        functools.partial(
            _encoder_cvae_kernel,
            in_dim=in_dim, in_pad=in_pad, l_pad=l_pad, latent=latent),
        out_shape=out_shape,
        grid_spec=pltpu.PrefetchScalarGridSpec(
            num_scalar_prefetch=0,
            grid=grid,
            in_specs=in_specs,
            out_specs=out_specs,
        ),
        compiler_params=pltpu.CompilerParams(
            dimension_semantics=("parallel",),
            vmem_limit_bytes=_default_vmem_limit_bytes(),
        ),
        cost_estimate=cost,
    )(u_p, prepared["w1"], prepared["b1"], prepared["w2"], prepared["b2"],
      prepared["wh"], prepared["bh"], eps_p)

    if b_pad != B:
        z, mu, sigma = z[:B], mu[:B], sigma[:B]
    return z, mu, sigma


def init_params(key, N, num_params, latent, hidden_dims):
    """PyTorch-Linear-style init (uniform +-1/sqrt(fan_in)).

    Weights stored as (in_features, out_features); biases as (1, out_features).
    """
    dims = [
        (N + num_params, hidden_dims[0]),   # l1
        (hidden_dims[0], hidden_dims[1]),   # l2
        (hidden_dims[1], latent),           # l3_mu
        (hidden_dims[1], latent),           # l3_sigma
    ]
    names = ["1", "2", "_mu", "_sigma"]
    params = {}
    for (fan_in, fan_out), name in zip(dims, names):
        key, kw, kb = jax.random.split(key, 3)
        bound = 1.0 / jnp.sqrt(jnp.float32(fan_in))
        params[f"w{name}"] = jax.random.uniform(
            kw, (fan_in, fan_out), jnp.float32, -bound, bound)
        params[f"b{name}"] = jax.random.uniform(
            kb, (1, fan_out), jnp.float32, -bound, bound)
    return params


if __name__ == "__main__":
    # Small shapes consistent with the module: u is (batch, N + num_params).
    N, num_params, latent = 16, 4, 8
    hidden_dims = [32, 32]
    batch = 8

    key = jax.random.PRNGKey(0)
    k_u, k_eps, k_p = jax.random.split(key, 3)

    u = jax.random.normal(k_u, (batch, N + num_params), jnp.float32)
    # epsilon generated in JAX glue (torch.randn_like in the reference); the
    # reparameterization arithmetic runs inside the kernel.
    eps = jax.random.normal(k_eps, (batch, latent), jnp.float32)
    params = init_params(k_p, N, num_params, latent, hidden_dims)

    # Weight padding/fusion hoisted out of the hot path -- do it once.
    prepared = prepare_encoder_params(params)

    z, mu, sigma = encoder_cvae_forward(u, prepared, eps)
    jax.block_until_ready((z, mu, sigma))

    # Pure-JAX reference of the same math.
    a1 = jnp.maximum(u @ params["w1"] + params["b1"], 0.0)
    a2 = jnp.maximum(a1 @ params["w2"] + params["b2"], 0.0)
    mu_ref = a2 @ params["w_mu"] + params["b_mu"]
    sg_ref = a2 @ params["w_sigma"] + params["b_sigma"]
    z_ref = mu_ref + jnp.exp(sg_ref / 2.0) * eps

    assert jnp.allclose(mu, mu_ref, atol=1e-5), "mu mismatch"
    assert jnp.allclose(sigma, sg_ref, atol=1e-5), "sigma mismatch"
    assert jnp.allclose(z, z_ref, atol=1e-5), "z mismatch"

    print("KERNEL_OK")
</pallas_src>

<mosaic_0001>
module attributes {stable_mosaic.version = 11 : i64} {
  func.func @_encoder_cvae_kernel(%arg0: i32, %arg1: memref<8x20xf32, #tpu.memory_space<vmem>>, %arg2: memref<128x128xf32, #tpu.memory_space<vmem>>, %arg3: memref<1x128xf32, #tpu.memory_space<vmem>>, %arg4: memref<128x128xf32, #tpu.memory_space<vmem>>, %arg5: memref<1x128xf32, #tpu.memory_space<vmem>>, %arg6: memref<128x256xf32, #tpu.memory_space<vmem>>, %arg7: memref<1x256xf32, #tpu.memory_space<vmem>>, %arg8: memref<8x8xf32, #tpu.memory_space<vmem>>, %arg9: memref<8x8xf32, #tpu.memory_space<vmem>>, %arg10: memref<8x8xf32, #tpu.memory_space<vmem>>, %arg11: memref<8x8xf32, #tpu.memory_space<vmem>>) attributes {dimension_semantics = [#tpu.dimension_semantics<parallel>], iteration_bounds = array<i64: 1>, scalar_prefetch = 0 : i64, scratch_operands = 0 : i64, tpu.core_type = #tpu.core_type<tc>, window_params = [{transform_indices = @transform_0, window_bounds = array<i64: 8, 20>}, {pipeline_mode = #tpu.pipeline_mode<synchronous>, transform_indices = @transform_1, window_bounds = array<i64: 128, 128>}, {pipeline_mode = #tpu.pipeline_mode<synchronous>, transform_indices = @transform_2, window_bounds = array<i64: 1, 128>}, {pipeline_mode = #tpu.pipeline_mode<synchronous>, transform_indices = @transform_3, window_bounds = array<i64: 128, 128>}, {pipeline_mode = #tpu.pipeline_mode<synchronous>, transform_indices = @transform_4, window_bounds = array<i64: 1, 128>}, {pipeline_mode = #tpu.pipeline_mode<synchronous>, transform_indices = @transform_5, window_bounds = array<i64: 128, 256>}, {pipeline_mode = #tpu.pipeline_mode<synchronous>, transform_indices = @transform_6, window_bounds = array<i64: 1, 256>}, {transform_indices = @transform_7, window_bounds = array<i64: 8, 8>}, {transform_indices = @transform_8, window_bounds = array<i64: 8, 8>}, {transform_indices = @transform_9, window_bounds = array<i64: 8, 8>}, {transform_indices = @transform_10, window_bounds = array<i64: 8, 8>}]} {
    %c0 = arith.constant 0 : index
    %c0_0 = arith.constant 0 : index
    %0 = vector.load %arg1[%c0, %c0_0] : memref<8x20xf32, #tpu.memory_space<vmem>>, vector<8x20xf32>
    %cst = arith.constant 0.000000e+00 : f32
    %1 = vector.broadcast %cst : f32 to vector<8x108xf32>
    %2 = tpu.concatenate %0, %1 in 1 : vector<8x20xf32>, vector<8x108xf32> -> vector<8x128xf32>
    %c0_1 = arith.constant 0 : index
    %c0_2 = arith.constant 0 : index
    %3 = vector.load %arg2[%c0_1, %c0_2] : memref<128x128xf32, #tpu.memory_space<vmem>>, vector<128x128xf32>
    %cst_3 = arith.constant dense<0.000000e+00> : vector<8x128xf32>
    %4 = tpu.matmul %2, %3, %cst_3 {dimension_numbers = #tpu.dot_dimension_numbers<[1], [0], [0], [1], [0, 0, 1, 1], [], []>} : vector<8x128xf32>, vector<128x128xf32>, vector<8x128xf32> -> vector<8x128xf32>
    %c0_4 = arith.constant 0 : index
    %c0_5 = arith.constant 0 : index
    %5 = vector.load %arg3[%c0_4, %c0_5] : memref<1x128xf32, #tpu.memory_space<vmem>>, vector<1x128xf32>
    %6 = vector.broadcast %5 : vector<1x128xf32> to vector<8x128xf32>
    %7 = arith.addf %4, %6 : vector<8x128xf32>
    %cst_6 = arith.constant 0.000000e+00 : f32
    %8 = vector.broadcast %cst_6 : f32 to vector<8x128xf32>
    %9 = arith.maximumf %7, %8 : vector<8x128xf32>
    %c0_7 = arith.constant 0 : index
    %c0_8 = arith.constant 0 : index
    %10 = vector.load %arg4[%c0_7, %c0_8] : memref<128x128xf32, #tpu.memory_space<vmem>>, vector<128x128xf32>
    %cst_9 = arith.constant dense<0.000000e+00> : vector<8x128xf32>
    %11 = tpu.matmul %9, %10, %cst_9 {dimension_numbers = #tpu.dot_dimension_numbers<[1], [0], [0], [1], [0, 0, 1, 1], [], []>} : vector<8x128xf32>, vector<128x128xf32>, vector<8x128xf32> -> vector<8x128xf32>
    %c0_10 = arith.constant 0 : index
    %c0_11 = arith.constant 0 : index
    %12 = vector.load %arg5[%c0_10, %c0_11] : memref<1x128xf32, #tpu.memory_space<vmem>>, vector<1x128xf32>
    %13 = vector.broadcast %12 : vector<1x128xf32> to vector<8x128xf32>
    %14 = arith.addf %11, %13 : vector<8x128xf32>
    %cst_12 = arith.constant 0.000000e+00 : f32
    %15 = vector.broadcast %cst_12 : f32 to vector<8x128xf32>
    %16 = arith.maximumf %14, %15 : vector<8x128xf32>
    %c0_13 = arith.constant 0 : index
    %c0_14 = arith.constant 0 : index
    %17 = vector.load %arg6[%c0_13, %c0_14] : memref<128x256xf32, #tpu.memory_space<vmem>>, vector<128x256xf32>
    %cst_15 = arith.constant dense<0.000000e+00> : vector<8x256xf32>
    %18 = tpu.matmul %16, %17, %cst_15 {dimension_numbers = #tpu.dot_dimension_numbers<[1], [0], [0], [1], [0, 0, 1, 1], [], []>} : vector<8x128xf32>, vector<128x256xf32>, vector<8x256xf32> -> vector<8x256xf32>
    %c0_16 = arith.constant 0 : index
    %c0_17 = arith.constant 0 : index
    %19 = vector.load %arg7[%c0_16, %c0_17] : memref<1x256xf32, #tpu.memory_space<vmem>>, vector<1x256xf32>
    %20 = vector.broadcast %19 : vector<1x256xf32> to vector<8x256xf32>
    %21 = arith.addf %18, %20 : vector<8x256xf32>
    %22 = vector.extract_strided_slice %21 {offsets = [0, 0], sizes = [8, 8], strides = [1, 1]} : vector<8x256xf32> to vector<8x8xf32>
    %23 = vector.extract_strided_slice %21 {offsets = [0, 128], sizes = [8, 8], strides = [1, 1]} : vector<8x256xf32> to vector<8x8xf32>
    %cst_18 = arith.constant 5.000000e-01 : f32
    %24 = vector.broadcast %cst_18 : f32 to vector<8x8xf32>
    %25 = arith.mulf %23, %24 : vector<8x8xf32>
    %26 = math.exp %25 : vector<8x8xf32>
    %c0_19 = arith.constant 0 : index
    %c0_20 = arith.constant 0 : index
    %27 = vector.load %arg8[%c0_19, %c0_20] : memref<8x8xf32, #tpu.memory_space<vmem>>, vector<8x8xf32>
    %28 = arith.mulf %26, %27 : vector<8x8xf32>
    %29 = arith.addf %22, %28 : vector<8x8xf32>
    %c0_21 = arith.constant 0 : index
    %c0_22 = arith.constant 0 : index
    %30 = vector.load %arg9[%c0_21, %c0_22] : memref<8x8xf32, #tpu.memory_space<vmem>>, vector<8x8xf32>
    tpu.vector_store %arg9[%c0_21, %c0_22], %29 {strides = array<i32>} : memref<8x8xf32, #tpu.memory_space<vmem>>, vector<8x8xf32>,
    %c0_23 = arith.constant 0 : index
    %c0_24 = arith.constant 0 : index
    %31 = vector.load %arg10[%c0_23, %c0_24] : memref<8x8xf32, #tpu.memory_space<vmem>>, vector<8x8xf32>
    tpu.vector_store %arg10[%c0_23, %c0_24], %22 {strides = array<i32>} : memref<8x8xf32, #tpu.memory_space<vmem>>, vector<8x8xf32>,
    %c0_25 = arith.constant 0 : index
    %c0_26 = arith.constant 0 : index
    %32 = vector.load %arg11[%c0_25, %c0_26] : memref<8x8xf32, #tpu.memory_space<vmem>>, vector<8x8xf32>
    tpu.vector_store %arg11[%c0_25, %c0_26], %23 {strides = array<i32>} : memref<8x8xf32, #tpu.memory_space<vmem>>, vector<8x8xf32>,
    return
  }
  func.func @transform_0(%arg0: i32) -> (i32, i32) {
    %c0_i32 = arith.constant 0 : i32
    %c0_i32_0 = arith.constant 0 : i32
    return %arg0, %c0_i32 : i32, i32
  }
  func.func @transform_1(%arg0: i32) -> (i32, i32) {
    %c0_i32 = arith.constant 0 : i32
    %c0_i32_0 = arith.constant 0 : i32
    %c0_i32_1 = arith.constant 0 : i32
    return %c0_i32, %c0_i32_0 : i32, i32
  }
  func.func @transform_2(%arg0: i32) -> (i32, i32) {
    %c0_i32 = arith.constant 0 : i32
    %c0_i32_0 = arith.constant 0 : i32
    %c0_i32_1 = arith.constant 0 : i32
    return %c0_i32, %c0_i32_0 : i32, i32
  }
  func.func @transform_3(%arg0: i32) -> (i32, i32) {
    %c0_i32 = arith.constant 0 : i32
    %c0_i32_0 = arith.constant 0 : i32
    %c0_i32_1 = arith.constant 0 : i32
    return %c0_i32, %c0_i32_0 : i32, i32
  }
  func.func @transform_4(%arg0: i32) -> (i32, i32) {
    %c0_i32 = arith.constant 0 : i32
    %c0_i32_0 = arith.constant 0 : i32
    %c0_i32_1 = arith.constant 0 : i32
    return %c0_i32, %c0_i32_0 : i32, i32
  }
  func.func @transform_5(%arg0: i32) -> (i32, i32) {
    %c0_i32 = arith.constant 0 : i32
    %c0_i32_0 = arith.constant 0 : i32
    %c0_i32_1 = arith.constant 0 : i32
    return %c0_i32, %c0_i32_0 : i32, i32
  }
  func.func @transform_6(%arg0: i32) -> (i32, i32) {
    %c0_i32 = arith.constant 0 : i32
    %c0_i32_0 = arith.constant 0 : i32
    %c0_i32_1 = arith.constant 0 : i32
    return %c0_i32, %c0_i32_0 : i32, i32
  }
  func.func @transform_7(%arg0: i32) -> (i32, i32) {
    %c0_i32 = arith.constant 0 : i32
    %c0_i32_0 = arith.constant 0 : i32
    return %arg0, %c0_i32 : i32, i32
  }
  func.func @transform_8(%arg0: i32) -> (i32, i32) {
    %c0_i32 = arith.constant 0 : i32
    %c0_i32_0 = arith.constant 0 : i32
    return %arg0, %c0_i32 : i32, i32
  }
  func.func @transform_9(%arg0: i32) -> (i32, i32) {
    %c0_i32 = arith.constant 0 : i32
    %c0_i32_0 = arith.constant 0 : i32
    return %arg0, %c0_i32 : i32, i32
  }
  func.func @transform_10(%arg0: i32) -> (i32, i32) {
    %c0_i32 = arith.constant 0 : i32
    %c0_i32_0 = arith.constant 0 : i32
    return %arg0, %c0_i32 : i32, i32
  }
}

</mosaic_0001>

<llo_original>
// kernel: tpu_custom_call.1
$region0: #{tpu_custom_call.1}
  #allocation0 [shape = 'u32[]', space=smem, size = 0x4, offset = 0x4, fixed_abs, tag = 'smem constant byte address 0x4 - core index']
  #allocation1 [shape = 'u32[144,128]{1,0:T(1,128)}', space=vmem, size = 0x12000, scoped, tag = 'internal scratch']
  %s0 = inlined_call_operand.hbm [shape: f32[8,20], index: 0, kind: input, shape index: {}]
  %s1 = inlined_call_operand.hbm [shape: f32[128,128], index: 1, kind: input, shape index: {}]
  %s2 = inlined_call_operand.vmem [shape: f32[1,128], index: 2, kind: input, shape index: {}]
  %s3 = inlined_call_operand.hbm [shape: f32[128,128], index: 3, kind: input, shape index: {}]
  %s4 = inlined_call_operand.vmem [shape: f32[1,128], index: 4, kind: input, shape index: {}]
  %s5 = inlined_call_operand.hbm [shape: f32[128,256], index: 5, kind: input, shape index: {}]
  %s6 = inlined_call_operand.vmem [shape: f32[1,256], index: 6, kind: input, shape index: {}]
  %s7 = inlined_call_operand.vmem [shape: f32[8,8], index: 7, kind: input, shape index: {}]
  %s8 = inlined_call_operand.hbm [shape: f32[8,8], index: 8, kind: output, shape index: {0}]
  %s9 = inlined_call_operand.hbm [shape: f32[8,8], index: 9, kind: output, shape index: {1}]
  %s10 = inlined_call_operand.hbm [shape: f32[8,8], index: 10, kind: output, shape index: {2}]
  %11 = xla_tuple %s8, %s9, %s10
  %s12 = sld [smem:[#allocation0]]
  $region74: #{tpu_custom_call.1} parent=0
    _
  %s14 = ssub.s32 1, %s12
  %s15 = scalar_select 0, %s14, %s12
  $region1: #{tpu_custom_call.1} parent=0
    #allocation2 [shape = 'u8[4096]{0}', space=vmem, size = 0x1000, scoped, tag = 'input window, operand 0, single buffered']
    #allocation3 [shape = 's32[1]{0}', space=sflag, size = 0x4, scoped, tag = 'scoped memory for tpu_custom_call.1']
    #allocation4 [shape = 's32[1]{0}', space=sflag, size = 0x4, scoped, tag = 'scoped memory for tpu_custom_call.1']
    #allocation5 [shape = 'u8[65536]{0}', space=vmem, size = 0x10000, scoped, tag = 'input window, operand 1, single buffered']
    #allocation6 [shape = 's32[1]{0}', space=sflag, size = 0x4, scoped, tag = 'scoped memory for tpu_custom_call.1']
    #allocation7 [shape = 'u8[65536]{0}', space=vmem, size = 0x10000, scoped, tag = 'input window, operand 3, single buffered']
    #allocation8 [shape = 'u8[131072]{0}', space=vmem, size = 0x20000, scoped, tag = 'input window, operand 5, single buffered']
    #allocation9 [shape = 's32[1]{0}', space=sflag, size = 0x4, scoped, tag = 'scoped memory for tpu_custom_call.1']
    #allocation10 [shape = 'u8[4096]{0}', space=vmem, size = 0x1000, scoped, tag = 'output window, operand 0, single buffered']
    #allocation11 [shape = 'u8[4096]{0}', space=vmem, size = 0x1000, scoped, tag = 'output window, operand 1, single buffered']
    #allocation12 [shape = 's32[1]{0}', space=sflag, size = 0x4, scoped, tag = 'scoped memory for tpu_custom_call.1']
    #allocation13 [shape = 'u8[4096]{0}', space=vmem, size = 0x1000, scoped, tag = 'output window, operand 2, single buffered']
    %16 = vsyncpa [#allocation3], 0
    %17 = vsyncpa [#allocation6], 0
    %18 = vsyncpa [#allocation9], 0
    %19 = vsyncpa [#allocation4], 0
    %20 = vsyncpa [#allocation12], 0
    // Predicated region
    $region2: #{tpu_custom_call.1} parent=1 // pred_check
      _
    $region3: #{tpu_custom_call.1} parent=1 // pred_check_branch
      %22 = sbr.rel (0) target = $region5
    $region4: #{tpu_custom_call.1} parent=1 // pred_region
      %s24 = ssub.s32 128, 128
      %25 = vsyncadd [#allocation3], %s24
      %s27 = sshll.u32 [#allocation2], 4
      %s28 = int_to_ptr.vmem [resolvable:$true] %s27
      %30 = dma.hbm_to_vmem [thread:$0]  %s0, 128, %s28, [#allocation3]
    $region5: #{tpu_custom_call.1} parent=1 // pred_fallthru
      _
    // Predicated region
    $region6: #{tpu_custom_call.1} parent=1 // pred_check
      _
    $region7: #{tpu_custom_call.1} parent=1 // pred_check_branch
      %32 = sbr.rel (0) target = $region9
    $region8: #{tpu_custom_call.1} parent=1 // pred_region
      %s34 = ssub.s32 2048, 2048
      %35 = vsyncadd [#allocation6], %s34
      %s36 = sshll.u32 [#allocation5], 4
      %s37 = int_to_ptr.vmem [resolvable:$true] %s36
      %42 = dma.hbm_to_vmem [thread:$0]  %s1, 2048, %s37, [#allocation6], 128, 128, 8
    $region9: #{tpu_custom_call.1} parent=1 // pred_fallthru
      _
    // Predicated region
    $region10: #{tpu_custom_call.1} parent=1 // pred_check
      _
    $region11: #{tpu_custom_call.1} parent=1 // pred_check_branch
      %44 = sbr.rel (0) target = $region13
    $region12: #{tpu_custom_call.1} parent=1 // pred_region
      _
    $region13: #{tpu_custom_call.1} parent=1 // pred_fallthru
      _
    // Predicated region
    $region14: #{tpu_custom_call.1} parent=1 // pred_check
      _
    $region15: #{tpu_custom_call.1} parent=1 // pred_check_branch
      %46 = sbr.rel (0) target = $region17
    $region16: #{tpu_custom_call.1} parent=1 // pred_region
      %s48 = ssub.s32 2048, 2048
      %49 = vsyncadd [#allocation6], %s48
      %s50 = sshll.u32 [#allocation7], 4
      %s51 = int_to_ptr.vmem [resolvable:$true] %s50
      %56 = dma.hbm_to_vmem [thread:$0]  %s3, 2048, %s51, [#allocation6], 128, 128, 8
    $region17: #{tpu_custom_call.1} parent=1 // pred_fallthru
      _
    // Predicated region
    $region18: #{tpu_custom_call.1} parent=1 // pred_check
      _
    $region19: #{tpu_custom_call.1} parent=1 // pred_check_branch
      %58 = sbr.rel (0) target = $region21
    $region20: #{tpu_custom_call.1} parent=1 // pred_region
      _
    $region21: #{tpu_custom_call.1} parent=1 // pred_fallthru
      _
    // Predicated region
    $region22: #{tpu_custom_call.1} parent=1 // pred_check
      _
    $region23: #{tpu_custom_call.1} parent=1 // pred_check_branch
      %60 = sbr.rel (0) target = $region25
    $region24: #{tpu_custom_call.1} parent=1 // pred_region
      %s62 = ssub.s32 4096, 4096
      %63 = vsyncadd [#allocation9], %s62
      %s64 = sshll.u32 [#allocation8], 4
      %s65 = int_to_ptr.vmem [resolvable:$true] %s64
      %70 = dma.hbm_to_vmem [thread:$0]  %s5, 4096, %s65, [#allocation9], 256, 256, 16
    $region25: #{tpu_custom_call.1} parent=1 // pred_fallthru
      _
    // Predicated region
    $region26: #{tpu_custom_call.1} parent=1 // pred_check
      _
    $region27: #{tpu_custom_call.1} parent=1 // pred_check_branch
      %72 = sbr.rel (0) target = $region29
    $region28: #{tpu_custom_call.1} parent=1 // pred_region
      _
    $region29: #{tpu_custom_call.1} parent=1 // pred_fallthru
      _
    // Predicated region
    $region30: #{tpu_custom_call.1} parent=1 // pred_check
      _
    $region31: #{tpu_custom_call.1} parent=1 // pred_check_branch
      %74 = sbr.rel (0) target = $region33
    $region32: #{tpu_custom_call.1} parent=1 // pred_region
      _
    $region33: #{tpu_custom_call.1} parent=1 // pred_fallthru
      _
    // Predicated region
    $region34: #{tpu_custom_call.1} parent=1 // pred_check
      _
    $region35: #{tpu_custom_call.1} parent=1 // pred_check_branch
      %76 = sbr.rel (0) target = $region37
    $region36: #{tpu_custom_call.1} parent=1 // pred_region
      %77 = dma.done [#allocation3], 128
    $region37: #{tpu_custom_call.1} parent=1 // pred_fallthru
      _
    // Predicated region
    $region38: #{tpu_custom_call.1} parent=1 // pred_check
      _
    $region39: #{tpu_custom_call.1} parent=1 // pred_check_branch
      %79 = sbr.rel (0) target = $region41
    $region40: #{tpu_custom_call.1} parent=1 // pred_region
      %80 = dma.done [#allocation6], 2048
    $region41: #{tpu_custom_call.1} parent=1 // pred_fallthru
      _
    // Predicated region
    $region42: #{tpu_custom_call.1} parent=1 // pred_check
      _
    $region43: #{tpu_custom_call.1} parent=1 // pred_check_branch
      %82 = sbr.rel (0) target = $region45
    $region44: #{tpu_custom_call.1} parent=1 // pred_region
      %83 = dma.done [#allocation6], 2048
    $region45: #{tpu_custom_call.1} parent=1 // pred_fallthru
      _
    // Predicated region
    $region46: #{tpu_custom_call.1} parent=1 // pred_check
      _
    $region47: #{tpu_custom_call.1} parent=1 // pred_check_branch
      %85 = sbr.rel (0) target = $region49
    $region48: #{tpu_custom_call.1} parent=1 // pred_region
      %86 = dma.done [#allocation9], 4096
    $region49: #{tpu_custom_call.1} parent=1 // pred_fallthru
      _
    %v87 = vld [vmem:[#allocation2] sm:$0xff]
    %vm88 = vcmask 162816
    %v89 = vsel %vm88, %v87, 0.0
    %v90 = vld [vmem:[#allocation5] sm:$0xff]
    %v91 = vld [vmem:[#allocation5 + $0x8] sm:$0xff]
    %v92 = vld [vmem:[#allocation5 + $0x10] sm:$0xff]
    %v93 = vld [vmem:[#allocation5 + $0x18] sm:$0xff]
    %v94 = vld [vmem:[#allocation5 + $0x20] sm:$0xff]
    %v95 = vld [vmem:[#allocation5 + $0x28] sm:$0xff]
    %v96 = vld [vmem:[#allocation5 + $0x30] sm:$0xff]
    %v97 = vld [vmem:[#allocation5 + $0x38] sm:$0xff]
    %v98 = vld [vmem:[#allocation5 + $0x40] sm:$0xff]
    %v99 = vld [vmem:[#allocation5 + $0x48] sm:$0xff]
    %v100 = vld [vmem:[#allocation5 + $0x50] sm:$0xff]
    %v101 = vld [vmem:[#allocation5 + $0x58] sm:$0xff]
    %v102 = vld [vmem:[#allocation5 + $0x60] sm:$0xff]
    %v103 = vld [vmem:[#allocation5 + $0x68] sm:$0xff]
    %v104 = vld [vmem:[#allocation5 + $0x70] sm:$0xff]
    %v105 = vld [vmem:[#allocation5 + $0x78] sm:$0xff]
    %v106 = vld [vmem:[%s2] sm:$0x1]
    %v108 = vlaneseq
    %v109 = vshrl.u32 %v108, 7
    %v110 = vsub.s32 0, %v109
    %v111 = vrot.slane %v106, %v110
    %113 = vmatprep.subr.mxu0 0.0
    %114 = vmatpush1.msra.mxu0 %v105
    %115 = vmatprep.subr.mxu0 0.0
    %116 = vmatpush1.msra.mxu0 %v104
    %117 = vmatprep.subr.mxu0 0.0
    %118 = vmatpush1.msra.mxu0 %v103
    %119 = vmatprep.subr.mxu0 0.0
    %120 = vmatpush1.msra.mxu0 %v102
    %121 = vmatprep.subr.mxu0 0.0
    %122 = vmatpush1.msra.mxu0 %v101
    %123 = vmatprep.subr.mxu0 0.0
    %124 = vmatpush1.msra.mxu0 %v100
    %125 = vmatprep.subr.mxu0 0.0
    %126 = vmatpush1.msra.mxu0 %v99
    %127 = vmatprep.subr.mxu0 0.0
    %128 = vmatpush1.msra.mxu0 %v98
    %129 = vmatprep.subr.mxu0 0.0
    %130 = vmatpush1.msra.mxu0 %v97
    %131 = vmatprep.subr.mxu0 0.0
    %132 = vmatpush1.msra.mxu0 %v96
    %133 = vmatprep.subr.mxu0 0.0
    %134 = vmatpush1.msra.mxu0 %v95
    %135 = vmatprep.subr.mxu0 0.0
    %136 = vmatpush1.msra.mxu0 %v94
    %137 = vmatprep.subr.mxu0 0.0
    %138 = vmatpush1.msra.mxu0 %v93
    %139 = vmatprep.subr.mxu0 0.0
    %140 = vmatpush1.msra.mxu0 %v92
    %141 = vmatprep.subr.mxu0 0.0
    %142 = vmatpush1.msra.mxu0 %v91
    %143 = vmatprep.subr.mxu0 0.0
    %144 = vmatpush1.msra.mxu0 %v90
    %145 = vmatprep.subr.mxu0 0.0
    %146 = vmatpush2.msra.mxu0 0.0
    %147 = vmatprep.subr.mxu0 0.0
    %148 = vmatpush2.msra.mxu0 0.0
    %149 = vmatprep.subr.mxu0 0.0
    %150 = vmatpush2.msra.mxu0 0.0
    %151 = vmatprep.subr.mxu0 0.0
    %152 = vmatpush2.msra.mxu0 0.0
    %153 = vmatprep.subr.mxu0 0.0
    %154 = vmatpush2.msra.mxu0 0.0
    %155 = vmatprep.subr.mxu0 0.0
    %156 = vmatpush2.msra.mxu0 0.0
    %157 = vmatprep.subr.mxu0 0.0
    %158 = vmatpush2.msra.mxu0 0.0
    %159 = vmatprep.subr.mxu0 0.0
    %160 = vmatpush2.msra.mxu0 0.0
    %161 = vmatprep.subr.mxu0 0.0
    %162 = vmatpush2.msra.mxu0 0.0
    %163 = vmatprep.subr.mxu0 0.0
    %164 = vmatpush2.msra.mxu0 0.0
    %165 = vmatprep.subr.mxu0 0.0
    %166 = vmatpush2.msra.mxu0 0.0
    %167 = vmatprep.subr.mxu0 0.0
    %168 = vmatpush2.msra.mxu0 0.0
    %169 = vmatprep.subr.mxu0 0.0
    %170 = vmatpush2.msra.mxu0 0.0
    %171 = vmatprep.subr.mxu0 0.0
    %172 = vmatpush2.msra.mxu0 0.0
    %173 = vmatprep.subr.mxu0 0.0
    %174 = vmatpush2.msra.mxu0 0.0
    %175 = vmatprep.subr.mxu0 0.0
    %176 = vmatpush2.msra.mxu0 0.0
    %177 = vmatprep.mubr.f32.mxu0 0.0
    %178 = vmatmul.mubr.f32.gmra.mxu0 %v89
    %v179 = vpop.f32.mrf.mxu0
    %v180 = vadd.f32 %v111, %v179
    %v181 = vpop.f32.mrf.mxu0
    %182 = vdwg.mxu0
    %v183 = vmax.f32 %v180, 0.0
    %v184 = vld [vmem:[#allocation7] sm:$0xff]
    %v185 = vld [vmem:[#allocation7 + $0x8] sm:$0xff]
    %v186 = vld [vmem:[#allocation7 + $0x10] sm:$0xff]
    %v187 = vld [vmem:[#allocation7 + $0x18] sm:$0xff]
    %v188 = vld [vmem:[#allocation7 + $0x20] sm:$0xff]
    %v189 = vld [vmem:[#allocation7 + $0x28] sm:$0xff]
    %v190 = vld [vmem:[#allocation7 + $0x30] sm:$0xff]
    %v191 = vld [vmem:[#allocation7 + $0x38] sm:$0xff]
    %v192 = vld [vmem:[#allocation7 + $0x40] sm:$0xff]
    %v193 = vld [vmem:[#allocation7 + $0x48] sm:$0xff]
    %v194 = vld [vmem:[#allocation7 + $0x50] sm:$0xff]
    %v195 = vld [vmem:[#allocation7 + $0x58] sm:$0xff]
    %v196 = vld [vmem:[#allocation7 + $0x60] sm:$0xff]
    %v197 = vld [vmem:[#allocation7 + $0x68] sm:$0xff]
    %v198 = vld [vmem:[#allocation7 + $0x70] sm:$0xff]
    %v199 = vld [vmem:[#allocation7 + $0x78] sm:$0xff]
    %v200 = vld [vmem:[%s4] sm:$0x1]
    %v202 = vlaneseq
    %v203 = vshrl.u32 %v202, 7
    %v204 = vsub.s32 0, %v203
    %v205 = vrot.slane %v200, %v204
    %207 = vmatprep.subr.mxu0 0.0
    %208 = vmatpush1.msra.mxu0 %v199
    %209 = vmatprep.subr.mxu0 0.0
    %210 = vmatpush1.msra.mxu0 %v198
    %211 = vmatprep.subr.mxu0 0.0
    %212 = vmatpush1.msra.mxu0 %v197
    %213 = vmatprep.subr.mxu0 0.0
    %214 = vmatpush1.msra.mxu0 %v196
    %215 = vmatprep.subr.mxu0 0.0
    %216 = vmatpush1.msra.mxu0 %v195
    %217 = vmatprep.subr.mxu0 0.0
    %218 = vmatpush1.msra.mxu0 %v194
    %219 = vmatprep.subr.mxu0 0.0
    %220 = vmatpush1.msra.mxu0 %v193
    %221 = vmatprep.subr.mxu0 0.0
    %222 = vmatpush1.msra.mxu0 %v192
    %223 = vmatprep.subr.mxu0 0.0
    %224 = vmatpush1.msra.mxu0 %v191
    %225 = vmatprep.subr.mxu0 0.0
    %226 = vmatpush1.msra.mxu0 %v190
    %227 = vmatprep.subr.mxu0 0.0
    %228 = vmatpush1.msra.mxu0 %v189
    %229 = vmatprep.subr.mxu0 0.0
    %230 = vmatpush1.msra.mxu0 %v188
    %231 = vmatprep.subr.mxu0 0.0
    %232 = vmatpush1.msra.mxu0 %v187
    %233 = vmatprep.subr.mxu0 0.0
    %234 = vmatpush1.msra.mxu0 %v186
    %235 = vmatprep.subr.mxu0 0.0
    %236 = vmatpush1.msra.mxu0 %v185
    %237 = vmatprep.subr.mxu0 0.0
    %238 = vmatpush1.msra.mxu0 %v184
    %239 = vmatprep.subr.mxu0 0.0
    %240 = vmatpush2.msra.mxu0 0.0
    %241 = vmatprep.subr.mxu0 0.0
    %242 = vmatpush2.msra.mxu0 0.0
    %243 = vmatprep.subr.mxu0 0.0
    %244 = vmatpush2.msra.mxu0 0.0
    %245 = vmatprep.subr.mxu0 0.0
    %246 = vmatpush2.msra.mxu0 0.0
    %247 = vmatprep.subr.mxu0 0.0
    %248 = vmatpush2.msra.mxu0 0.0
    %249 = vmatprep.subr.mxu0 0.0
    %250 = vmatpush2.msra.mxu0 0.0
    %251 = vmatprep.subr.mxu0 0.0
    %252 = vmatpush2.msra.mxu0 0.0
    %253 = vmatprep.subr.mxu0 0.0
    %254 = vmatpush2.msra.mxu0 0.0
    %255 = vmatprep.subr.mxu0 0.0
    %256 = vmatpush2.msra.mxu0 0.0
    %257 = vmatprep.subr.mxu0 0.0
    %258 = vmatpush2.msra.mxu0 0.0
    %259 = vmatprep.subr.mxu0 0.0
    %260 = vmatpush2.msra.mxu0 0.0
    %261 = vmatprep.subr.mxu0 0.0
    %262 = vmatpush2.msra.mxu0 0.0
    %263 = vmatprep.subr.mxu0 0.0
    %264 = vmatpush2.msra.mxu0 0.0
    %265 = vmatprep.subr.mxu0 0.0
    %266 = vmatpush2.msra.mxu0 0.0
    %267 = vmatprep.subr.mxu0 0.0
    %268 = vmatpush2.msra.mxu0 0.0
    %269 = vmatprep.subr.mxu0 0.0
    %270 = vmatpush2.msra.mxu0 0.0
    %271 = vmatprep.mubr.f32.mxu0 0.0
    %272 = vmatmul.mubr.f32.gmra.mxu0 %v183
    %v273 = vpop.f32.mrf.mxu0
    %v274 = vadd.f32 %v205, %v273
    %v275 = vpop.f32.mrf.mxu0
    %276 = vdwg.mxu0
    %v277 = vmax.f32 %v274, 0.0
    %v278 = vld [vmem:[#allocation8] sm:$0xff]
    %v279 = vld [vmem:[#allocation8 + $0x8] sm:$0xff]
    %v280 = vld [vmem:[#allocation8 + $0x10] sm:$0xff]
    %v281 = vld [vmem:[#allocation8 + $0x18] sm:$0xff]
    %v282 = vld [vmem:[#allocation8 + $0x20] sm:$0xff]
    %v283 = vld [vmem:[#allocation8 + $0x28] sm:$0xff]
    %v284 = vld [vmem:[#allocation8 + $0x30] sm:$0xff]
    %v285 = vld [vmem:[#allocation8 + $0x38] sm:$0xff]
    %v286 = vld [vmem:[#allocation8 + $0x40] sm:$0xff]
    %v287 = vld [vmem:[#allocation8 + $0x48] sm:$0xff]
    %v288 = vld [vmem:[#allocation8 + $0x50] sm:$0xff]
    %v289 = vld [vmem:[#allocation8 + $0x58] sm:$0xff]
    %v290 = vld [vmem:[#allocation8 + $0x60] sm:$0xff]
    %v291 = vld [vmem:[#allocation8 + $0x68] sm:$0xff]
    %v292 = vld [vmem:[#allocation8 + $0x70] sm:$0xff]
    %v293 = vld [vmem:[#allocation8 + $0x78] sm:$0xff]
    %v294 = vld [vmem:[#allocation8 + $0x80] sm:$0xff]
    %v295 = vld [vmem:[#allocation8 + $0x88] sm:$0xff]
    %v296 = vld [vmem:[#allocation8 + $0x90] sm:$0xff]
    %v297 = vld [vmem:[#allocation8 + $0x98] sm:$0xff]
    %v298 = vld [vmem:[#allocation8 + $0xa0] sm:$0xff]
    %v299 = vld [vmem:[#allocation8 + $0xa8] sm:$0xff]
    %v300 = vld [vmem:[#allocation8 + $0xb0] sm:$0xff]
    %v301 = vld [vmem:[#allocation8 + $0xb8] sm:$0xff]
    %v302 = vld [vmem:[#allocation8 + $0xc0] sm:$0xff]
    %v303 = vld [vmem:[#allocation8 + $0xc8] sm:$0xff]
    %v304 = vld [vmem:[#allocation8 + $0xd0] sm:$0xff]
    %v305 = vld [vmem:[#allocation8 + $0xd8] sm:$0xff]
    %v306 = vld [vmem:[#allocation8 + $0xe0] sm:$0xff]
    %v307 = vld [vmem:[#allocation8 + $0xe8] sm:$0xff]
    %v308 = vld [vmem:[#allocation8 + $0xf0] sm:$0xff]
    %v309 = vld [vmem:[#allocation8 + $0xf8] sm:$0xff]
    %v310 = vld [vmem:[%s6] sm:$0x3]
    %v312 = vlaneseq
    %v313 = vshrl.u32 %v312, 7
    %v314 = vsub.s32 0, %v313
    %v315 = vrot.slane %v310, %v314
    %v316 = vlaneseq
    %v317 = vshrl.u32 %v316, 7
    %v318 = vsub.s32 1, %v317
    %v319 = vrot.slane %v310, %v318
    %322 = vmatprep.subr.mxu0 %v309
    %323 = vmatpush1.msra.mxu0 %v308
    %324 = vmatprep.subr.mxu0 %v307
    %325 = vmatpush1.msra.mxu0 %v306
    %326 = vmatprep.subr.mxu0 %v305
    %327 = vmatpush1.msra.mxu0 %v304
    %328 = vmatprep.subr.mxu0 %v303
    %329 = vmatpush1.msra.mxu0 %v302
    %330 = vmatprep.subr.mxu0 %v301
    %331 = vmatpush1.msra.mxu0 %v300
    %332 = vmatprep.subr.mxu0 %v299
    %333 = vmatpush1.msra.mxu0 %v298
    %334 = vmatprep.subr.mxu0 %v297
    %335 = vmatpush1.msra.mxu0 %v296
    %336 = vmatprep.subr.mxu0 %v295
    %337 = vmatpush1.msra.mxu0 %v294
    %338 = vmatprep.subr.mxu0 %v293
    %339 = vmatpush1.msra.mxu0 %v292
    %340 = vmatprep.subr.mxu0 %v291
    %341 = vmatpush1.msra.mxu0 %v290
    %342 = vmatprep.subr.mxu0 %v289
    %343 = vmatpush1.msra.mxu0 %v288
    %344 = vmatprep.subr.mxu0 %v287
    %345 = vmatpush1.msra.mxu0 %v286
    %346 = vmatprep.subr.mxu0 %v285
    %347 = vmatpush1.msra.mxu0 %v284
    %348 = vmatprep.subr.mxu0 %v283
    %349 = vmatpush1.msra.mxu0 %v282
    %350 = vmatprep.subr.mxu0 %v281
    %351 = vmatpush1.msra.mxu0 %v280
    %352 = vmatprep.subr.mxu0 %v279
    %353 = vmatpush1.msra.mxu0 %v278
    %354 = vmatprep.subr.mxu0 0.0
    %355 = vmatpush2.msra.mxu0 0.0
    %356 = vmatprep.subr.mxu0 0.0
    %357 = vmatpush2.msra.mxu0 0.0
    %358 = vmatprep.subr.mxu0 0.0
    %359 = vmatpush2.msra.mxu0 0.0
    %360 = vmatprep.subr.mxu0 0.0
    %361 = vmatpush2.msra.mxu0 0.0
    %362 = vmatprep.subr.mxu0 0.0
    %363 = vmatpush2.msra.mxu0 0.0
    %364 = vmatprep.subr.mxu0 0.0
    %365 = vmatpush2.msra.mxu0 0.0
    %366 = vmatprep.subr.mxu0 0.0
    %367 = vmatpush2.msra.mxu0 0.0
    %368 = vmatprep.subr.mxu0 0.0
    %369 = vmatpush2.msra.mxu0 0.0
    %370 = vmatprep.subr.mxu0 0.0
    %371 = vmatpush2.msra.mxu0 0.0
    %372 = vmatprep.subr.mxu0 0.0
    %373 = vmatpush2.msra.mxu0 0.0
    %374 = vmatprep.subr.mxu0 0.0
    %375 = vmatpush2.msra.mxu0 0.0
    %376 = vmatprep.subr.mxu0 0.0
    %377 = vmatpush2.msra.mxu0 0.0
    %378 = vmatprep.subr.mxu0 0.0
    %379 = vmatpush2.msra.mxu0 0.0
    %380 = vmatprep.subr.mxu0 0.0
    %381 = vmatpush2.msra.mxu0 0.0
    %382 = vmatprep.subr.mxu0 0.0
    %383 = vmatpush2.msra.mxu0 0.0
    %384 = vmatprep.subr.mxu0 0.0
    %385 = vmatpush2.msra.mxu0 0.0
    %386 = vmatprep.mubr.f32.mxu0 0.0
    %387 = vmatmul.mubr.f32.gmra.mxu0 %v277
    %v388 = vpop.f32.mrf.mxu0
    %v389 = vadd.f32 %v315, %v388
    %v390 = vpop.f32.mrf.mxu0
    %v391 = vadd.f32 %v319, %v390
    %392 = vdwg.mxu0
    %v393 = vmul.f32 %v391, 0.5
    %v394 = vmul.f32 %v393, 1.442695
    %v395 = vpow.pop %v394
    %v396 = vld [vmem:[%s7] sm:$0xff]
    %v397 = vmul.f32 %v395, %v396
    %v398 = vadd.f32 %v389, %v397
    %vm399 = vcmask 64512
    %400 = vst.msk [vmem:[#allocation10] sm:$0xff] %vm399, %v398
    %401 = vst.msk [vmem:[#allocation11] sm:$0xff] %vm399, %v389
    %402 = vst.msk [vmem:[#allocation13] sm:$0xff] %vm399, %v391
    // Predicated region
    $region50: #{tpu_custom_call.1} parent=1 // pred_check
      _
    $region51: #{tpu_custom_call.1} parent=1 // pred_check_branch
      %404 = sbr.rel (0) target = $region53
    $region52: #{tpu_custom_call.1} parent=1 // pred_region
      %s406 = ssub.s32 128, 128
      %407 = vsyncadd [#allocation4], %s406
      %s409 = sshll.u32 [#allocation10], 4
      %s410 = int_to_ptr.vmem [resolvable:$true] %s409
      %412 = dma.vmem_to_hbm [thread:$0]  %s410, 128, %s8, [#allocation4]
    $region53: #{tpu_custom_call.1} parent=1 // pred_fallthru
      _
    // Predicated region
    $region54: #{tpu_custom_call.1} parent=1 // pred_check
      _
    $region55: #{tpu_custom_call.1} parent=1 // pred_check_branch
      %414 = sbr.rel (0) target = $region57
    $region56: #{tpu_custom_call.1} parent=1 // pred_region
      %s416 = ssub.s32 128, 128
      %417 = vsyncadd [#allocation12], %s416
      %s419 = sshll.u32 [#allocation11], 4
      %s420 = int_to_ptr.vmem [resolvable:$true] %s419
      %422 = dma.vmem_to_hbm [thread:$0]  %s420, 128, %s9, [#allocation12]
    $region57: #{tpu_custom_call.1} parent=1 // pred_fallthru
      _
    // Predicated region
    $region58: #{tpu_custom_call.1} parent=1 // pred_check
      _
    $region59: #{tpu_custom_call.1} parent=1 // pred_check_branch
      %424 = sbr.rel (0) target = $region61
    $region60: #{tpu_custom_call.1} parent=1 // pred_region
      %s426 = ssub.s32 128, 128
      %427 = vsyncadd [#allocation12], %s426
      %s429 = sshll.u32 [#allocation13], 4
      %s430 = int_to_ptr.vmem [resolvable:$true] %s429
      %432 = dma.vmem_to_hbm [thread:$0]  %s430, 128, %s10, [#allocation12]
    $region61: #{tpu_custom_call.1} parent=1 // pred_fallthru
      _
    // Predicated region
    $region62: #{tpu_custom_call.1} parent=1 // pred_check
      _
    $region63: #{tpu_custom_call.1} parent=1 // pred_check_branch
      %434 = sbr.rel (0) target = $region65
    $region64: #{tpu_custom_call.1} parent=1 // pred_region
      %435 = dma.done [#allocation4], 128
    $region65: #{tpu_custom_call.1} parent=1 // pred_fallthru
      _
    // Predicated region
    $region66: #{tpu_custom_call.1} parent=1 // pred_check
      _
    $region67: #{tpu_custom_call.1} parent=1 // pred_check_branch
      %437 = sbr.rel (0) target = $region69
    $region68: #{tpu_custom_call.1} parent=1 // pred_region
      %438 = dma.done [#allocation12], 128
    $region69: #{tpu_custom_call.1} parent=1 // pred_fallthru
      _
    // Predicated region
    $region70: #{tpu_custom_call.1} parent=1 // pred_check
      _
    $region71: #{tpu_custom_call.1} parent=1 // pred_check_branch
      %440 = sbr.rel (0) target = $region73
    $region72: #{tpu_custom_call.1} parent=1 // pred_region
      %441 = dma.done [#allocation12], 128
    $region73: #{tpu_custom_call.1} parent=1 // pred_fallthru
      _
    %442 = vsyncpa [#allocation3], 1
    %443 = vsyncpa [#allocation6], 1
    %444 = vsyncpa [#allocation9], 1
    %445 = vsyncpa [#allocation4], 1
    %446 = vsyncpa [#allocation12], 1

</llo_original>
